<compile_context>
chip_gen: v5e
topology: v5e:2x2
jax: 0.10.0
libtpu: 0.0.40
codegen_flags: <defaults>
</compile_context>

<pallas_src>
import jax
import jax.numpy as jnp
from jax.experimental import pallas as pl
from jax.experimental.pallas import tpu as pltpu  # noqa: F401  (CompilerParams needed only at real ESM dims)


# ----------------------------- model dims (small) -----------------------------
B = 2          # batch
S = 8          # sequence length
H = 32         # hidden size
NH = 4         # attention heads
DH = H // NH   # head dim
F = 64         # FFN hidden size
VOCAB = 33     # ESM alphabet size
EPS = 1e-5

BS = B * S                     # tokens processed per kernel call
SCALE = 1.0 / (DH ** 0.5)
NEG_INF = -1e9                 # additive mask value (exp underflows to exactly 0)

# Head split relies on heads exactly tiling the hidden dim and on
# sublane-aligned slices (review: make the invariant explicit).
assert NH * DH == H
assert H % 8 == 0 and DH % 8 == 0 and F % 8 == 0


def _layer_norm_t(x, gamma, beta):
    """LayerNorm over the hidden axis; x is transposed: (hidden, tokens)."""
    mu = jnp.mean(x, axis=0, keepdims=True)
    d = x - mu
    var = jnp.mean(d * d, axis=0, keepdims=True)
    return d * jax.lax.rsqrt(var + EPS) * gamma + beta


def encoder_block_kernel(
    x_ref,                 # (H, BS)  f32   activations, hidden on sublanes
    wqkv_ref, bqkv_ref,    # (3H, H) bf16, (3H, 1) f32   fused QKV (Q rows pre-scaled)
    wo_ref, bo_ref,        # (H, H)  bf16, (H, 1)  f32
    g1_ref, b1_ref,        # (H, 1)  f32   LN1
    g2_ref, b2_ref,        # (H, 1)  f32   LN2
    w1_ref, c1_ref,        # (F, H)  bf16, (F, 1)  f32
    w2_ref, c2_ref,        # (H, F)  bf16, (H, 1)  f32
    bias_ref,              # (BS, BS) f32  additive attention mask (block-diag over batch)
    o_ref,                 # (H, BS)  f32
):
    x = x_ref[...]                                            # (H, BS) f32

    # ---- pre-LN fused-QKV multi-head self-attention ----
    xn = _layer_norm_t(x, g1_ref[...], b1_ref[...])
    # One MXU push for Q, K and V; 1/sqrt(DH) is folded into the Q rows of wqkv.
    qkv = jnp.dot(wqkv_ref[...], xn.astype(jnp.bfloat16),
                  preferred_element_type=jnp.float32) + bqkv_ref[...]   # (3H, BS) f32

    # Head split: sublane slices + leading-dim reshapes — no lane relayouts,
    # no scratch stores.  bf16 casts only at the MXU operands.
    q = qkv[0:H].reshape(NH, DH, BS).astype(jnp.bfloat16)
    k = qkv[H:2 * H].reshape(NH, DH, BS).astype(jnp.bfloat16)
    v = qkv[2 * H:3 * H].reshape(NH, DH, BS).astype(jnp.bfloat16)

    # Scores for all heads / all batch rows in ONE batched dot_general
    # (einsum 'hdi,hdj->hij'):  s[h, i, j] = sum_d q[h, d, i] * k[h, d, j]
    s = jax.lax.dot_general(q, k, (((1,), (1,)), ((0,), (0,))),
                            preferred_element_type=jnp.float32)         # (NH, BS, BS)
    # Block-diagonal mask keeps the two sequences from attending to each other.
    # TODO(synk): a real ProteinEncoder also folds its padding mask in here.
    s = s + bias_ref[...]
    s = s - jnp.max(s, axis=-1, keepdims=True)
    p = jnp.exp(s)
    # approx reciprocal runs on the EUP slot; tiny deviation from exact softmax.
    p = p * pl.reciprocal(jnp.sum(p, axis=-1, keepdims=True), approx=True)

    # PV in ONE batched dot_general (einsum 'hdj,hij->hdi'):
    #   ctx[h, d, i] = sum_j v[h, d, j] * p[h, i, j]
    ctx = jax.lax.dot_general(v, p.astype(jnp.bfloat16),
                              (((2,), (2,)), ((0,), (0,))),
                              preferred_element_type=jnp.float32)        # (NH, DH, BS)
    ctx = ctx.reshape(H, BS)            # merge leading dims — no relayout

    attn = jnp.dot(wo_ref[...], ctx.astype(jnp.bfloat16),
                   preferred_element_type=jnp.float32) + bo_ref[...]
    x = x + attn

    # ---- pre-LN MLP (GELU) ----
    xn2 = _layer_norm_t(x, g2_ref[...], b2_ref[...])
    h = jnp.dot(w1_ref[...], xn2.astype(jnp.bfloat16),
                preferred_element_type=jnp.float32) + c1_ref[...]        # (F, BS)
    # TODO(synk): reference (nn.GELU / ESM) uses exact erf GELU; tanh approximation here.
    h = jax.nn.gelu(h, approximate=True)
    mlp = jnp.dot(w2_ref[...], h.astype(jnp.bfloat16),
                  preferred_element_type=jnp.float32) + c2_ref[...]      # (H, BS)

    # Natural-layout store (2 KB); the wrapper transposes back.
    o_ref[...] = x + mlp


@jax.jit
def protein_encoder_forward(tokens, params):
    # Embedding lookup (glue, plain JAX); transpose to the kernel's
    # (hidden, tokens) layout so head splits inside the kernel are free.
    x_t = params["embed"][tokens].reshape(BS, H).T            # (H, BS)

    # Single invocation, everything VMEM-resident (tiny model).
    # NOTE(v7x): at real ESM dims use grid=(B,) + dimension_semantics=("parallel",)
    # and tile against 64 MiB VMEM with an explicit vmem_limit_bytes.
    out_t = pl.pallas_call(
        encoder_block_kernel,
        out_shape=jax.ShapeDtypeStruct((H, BS), jnp.float32),
    )(
        x_t,
        params["wqkv_t"], params["bqkv_t"],
        params["wo_t"], params["bo_t"],
        params["ln1_g"], params["ln1_b"],
        params["ln2_g"], params["ln2_b"],
        params["w1_t"], params["c1_t"],
        params["w2_t"], params["c2_t"],
        params["attn_bias"],
    )
    return out_t.T.reshape(B, S, H)


def init_params(key):
    """Synthetic weights, prepared ONCE in the layout the kernel wants
    (QKV fusion, transposes, bf16 casts, (dim,1) biases, scale folding, mask)."""
    ks = jax.random.split(key, 7)
    n = lambda k, shape, s: jax.random.normal(k, shape, jnp.float32) * s

    embed = n(ks[0], (VOCAB, H), 0.02)
    wq, wk, wv, wo = (n(ks[i], (H, H), 0.05) for i in range(1, 5))
    w1 = n(ks[5], (H, F), 0.05)
    w2 = n(ks[6], (F, H), 0.05)
    bq = bk = bv = bo = jnp.zeros((H,), jnp.float32)
    c1 = jnp.zeros((F,), jnp.float32)
    c2 = jnp.zeros((H,), jnp.float32)

    # Fused, transposed QKV weight; 1/sqrt(DH) folded into the Q rows/bias.
    wqkv_t = jnp.concatenate([(wq * SCALE).T, wk.T, wv.T], axis=0).astype(jnp.bfloat16)
    bqkv_t = jnp.concatenate([bq * SCALE, bk, bv]).reshape(3 * H, 1)

    # Block-diagonal additive mask: tokens attend only within their own sequence.
    seg = jnp.arange(BS, dtype=jnp.int32) // S
    attn_bias = jnp.where(seg[:, None] == seg[None, :], 0.0, NEG_INF).astype(jnp.float32)

    return {
        "embed": embed,
        "wqkv_t": wqkv_t, "bqkv_t": bqkv_t,
        "wo_t": wo.T.astype(jnp.bfloat16), "bo_t": bo.reshape(H, 1),
        "ln1_g": jnp.ones((H, 1), jnp.float32), "ln1_b": jnp.zeros((H, 1), jnp.float32),
        "ln2_g": jnp.ones((H, 1), jnp.float32), "ln2_b": jnp.zeros((H, 1), jnp.float32),
        "w1_t": w1.T.astype(jnp.bfloat16), "c1_t": c1.reshape(F, 1),
        "w2_t": w2.T.astype(jnp.bfloat16), "c2_t": c2.reshape(H, 1),
        "attn_bias": attn_bias,
    }


if __name__ == "__main__":
    key = jax.random.PRNGKey(0)
    k_tok, k_par = jax.random.split(key)
    tokens = jax.random.randint(k_tok, (B, S), 0, VOCAB, dtype=jnp.int32)
    params = init_params(k_par)

    out = protein_encoder_forward(tokens, params)
    out = jax.block_until_ready(out)
    assert out.shape == (B, S, H) and out.dtype == jnp.float32
    assert bool(jnp.all(jnp.isfinite(out)))
    print("KERNEL_OK")
</pallas_src>

<mosaic_0001>
module attributes {stable_mosaic.version = 11 : i64} {
  func.func @encoder_block_kernel(%arg0: memref<32x16xf32, #tpu.memory_space<vmem>>, %arg1: memref<96x32xbf16, #tpu.memory_space<vmem>>, %arg2: memref<96x1xf32, #tpu.memory_space<vmem>>, %arg3: memref<32x32xbf16, #tpu.memory_space<vmem>>, %arg4: memref<32x1xf32, #tpu.memory_space<vmem>>, %arg5: memref<32x1xf32, #tpu.memory_space<vmem>>, %arg6: memref<32x1xf32, #tpu.memory_space<vmem>>, %arg7: memref<32x1xf32, #tpu.memory_space<vmem>>, %arg8: memref<32x1xf32, #tpu.memory_space<vmem>>, %arg9: memref<64x32xbf16, #tpu.memory_space<vmem>>, %arg10: memref<64x1xf32, #tpu.memory_space<vmem>>, %arg11: memref<32x64xbf16, #tpu.memory_space<vmem>>, %arg12: memref<32x1xf32, #tpu.memory_space<vmem>>, %arg13: memref<16x16xf32, #tpu.memory_space<vmem>>, %arg14: memref<32x16xf32, #tpu.memory_space<vmem>>) attributes {dimension_semantics = [], scalar_prefetch = 0 : i64, scratch_operands = 0 : i64, tpu.core_type = #tpu.core_type<tc>} {
    %c0 = arith.constant 0 : index
    %c0_0 = arith.constant 0 : index
    %0 = vector.load %arg0[%c0, %c0_0] : memref<32x16xf32, #tpu.memory_space<vmem>>, vector<32x16xf32>
    %c0_1 = arith.constant 0 : index
    %c0_2 = arith.constant 0 : index
    %1 = vector.load %arg5[%c0_1, %c0_2] : memref<32x1xf32, #tpu.memory_space<vmem>>, vector<32x1xf32>
    %c0_3 = arith.constant 0 : index
    %c0_4 = arith.constant 0 : index
    %2 = vector.load %arg6[%c0_3, %c0_4] : memref<32x1xf32, #tpu.memory_space<vmem>>, vector<32x1xf32>
    %cst = arith.constant dense<0.000000e+00> : vector<16xf32>
    %3 = vector.multi_reduction <add>, %0, %cst [0] : vector<32x16xf32> to vector<16xf32>
    %4 = vector.shape_cast %3 : vector<16xf32> to vector<1x16xf32>
    %cst_5 = arith.constant 3.200000e+01 : f32
    %5 = vector.broadcast %cst_5 : f32 to vector<1x16xf32>
    %6 = arith.divf %4, %5 : vector<1x16xf32>
    %7 = vector.broadcast %6 : vector<1x16xf32> to vector<32x16xf32>
    %8 = arith.subf %0, %7 : vector<32x16xf32>
    %9 = arith.mulf %8, %8 : vector<32x16xf32>
    %cst_6 = arith.constant dense<0.000000e+00> : vector<16xf32>
    %10 = vector.multi_reduction <add>, %9, %cst_6 [0] : vector<32x16xf32> to vector<16xf32>
    %11 = vector.shape_cast %10 : vector<16xf32> to vector<1x16xf32>
    %cst_7 = arith.constant 3.200000e+01 : f32
    %12 = vector.broadcast %cst_7 : f32 to vector<1x16xf32>
    %13 = arith.divf %11, %12 : vector<1x16xf32>
    %cst_8 = arith.constant 9.99999974E-6 : f32
    %14 = vector.broadcast %cst_8 : f32 to vector<1x16xf32>
    %15 = arith.addf %13, %14 : vector<1x16xf32>
    %16 = math.rsqrt %15 : vector<1x16xf32>
    %17 = vector.broadcast %16 : vector<1x16xf32> to vector<32x16xf32>
    %18 = arith.mulf %8, %17 : vector<32x16xf32>
    %19 = vector.broadcast %1 : vector<32x1xf32> to vector<32x16xf32>
    %20 = arith.mulf %18, %19 : vector<32x16xf32>
    %21 = vector.broadcast %2 : vector<32x1xf32> to vector<32x16xf32>
    %22 = arith.addf %20, %21 : vector<32x16xf32>
    %c0_9 = arith.constant 0 : index
    %c0_10 = arith.constant 0 : index
    %23 = vector.load %arg1[%c0_9, %c0_10] : memref<96x32xbf16, #tpu.memory_space<vmem>>, vector<96x32xbf16>
    %24 = arith.truncf %22 : vector<32x16xf32> to vector<32x16xbf16>
    %cst_11 = arith.constant dense<0.000000e+00> : vector<96x16xf32>
    %25 = tpu.matmul %23, %24, %cst_11 {dimension_numbers = #tpu.dot_dimension_numbers<[1], [0], [0], [1], [0, 0, 1, 1], [], []>} : vector<96x32xbf16>, vector<32x16xbf16>, vector<96x16xf32> -> vector<96x16xf32>
    %c0_12 = arith.constant 0 : index
    %c0_13 = arith.constant 0 : index
    %26 = vector.load %arg2[%c0_12, %c0_13] : memref<96x1xf32, #tpu.memory_space<vmem>>, vector<96x1xf32>
    %27 = vector.broadcast %26 : vector<96x1xf32> to vector<96x16xf32>
    %28 = arith.addf %25, %27 : vector<96x16xf32>
    %29 = vector.extract_strided_slice %28 {offsets = [0, 0], sizes = [32, 16], strides = [1, 1]} : vector<96x16xf32> to vector<32x16xf32>
    %30 = vector.shape_cast %29 : vector<32x16xf32> to vector<4x8x16xf32>
    %31 = arith.truncf %30 : vector<4x8x16xf32> to vector<4x8x16xbf16>
    %32 = vector.extract_strided_slice %28 {offsets = [32, 0], sizes = [32, 16], strides = [1, 1]} : vector<96x16xf32> to vector<32x16xf32>
    %33 = vector.shape_cast %32 : vector<32x16xf32> to vector<4x8x16xf32>
    %34 = arith.truncf %33 : vector<4x8x16xf32> to vector<4x8x16xbf16>
    %35 = vector.extract_strided_slice %28 {offsets = [64, 0], sizes = [32, 16], strides = [1, 1]} : vector<96x16xf32> to vector<32x16xf32>
    %36 = vector.shape_cast %35 : vector<32x16xf32> to vector<4x8x16xf32>
    %37 = arith.truncf %36 : vector<4x8x16xf32> to vector<4x8x16xbf16>
    %cst_14 = arith.constant dense<0.000000e+00> : vector<4x16x16xf32>
    %38 = tpu.matmul %31, %34, %cst_14 {dimension_numbers = #tpu.dot_dimension_numbers<[1], [1], [2], [2], [0, 0, 0, 2, 1, 2], [0], [0]>} : vector<4x8x16xbf16>, vector<4x8x16xbf16>, vector<4x16x16xf32> -> vector<4x16x16xf32>
    %c0_15 = arith.constant 0 : index
    %c0_16 = arith.constant 0 : index
    %39 = vector.load %arg13[%c0_15, %c0_16] : memref<16x16xf32, #tpu.memory_space<vmem>>, vector<16x16xf32>
    %40 = vector.shape_cast %39 : vector<16x16xf32> to vector<1x16x16xf32>
    %41 = vector.broadcast %40 : vector<1x16x16xf32> to vector<4x16x16xf32>
    %42 = arith.addf %38, %41 : vector<4x16x16xf32>
    %cst_17 = arith.constant dense<0xFF800000> : vector<4x16xf32>
    %43 = vector.multi_reduction <maximumf>, %42, %cst_17 [2] : vector<4x16x16xf32> to vector<4x16xf32>
    %44 = vector.shape_cast %43 : vector<4x16xf32> to vector<4x16x1xf32>
    %45 = vector.broadcast %44 : vector<4x16x1xf32> to vector<4x16x16xf32>
    %46 = arith.subf %42, %45 : vector<4x16x16xf32>
    %47 = math.exp %46 : vector<4x16x16xf32>
    %cst_18 = arith.constant dense<0.000000e+00> : vector<4x16xf32>
    %48 = vector.multi_reduction <add>, %47, %cst_18 [2] : vector<4x16x16xf32> to vector<4x16xf32>
    %49 = vector.shape_cast %48 : vector<4x16xf32> to vector<4x16x1xf32>
    %50 = tpu.reciprocal %49 {approx = true} : vector<4x16x1xf32> -> vector<4x16x1xf32>
    %51 = vector.broadcast %50 : vector<4x16x1xf32> to vector<4x16x16xf32>
    %52 = arith.mulf %47, %51 : vector<4x16x16xf32>
    %53 = arith.truncf %52 : vector<4x16x16xf32> to vector<4x16x16xbf16>
    %cst_19 = arith.constant dense<0.000000e+00> : vector<4x8x16xf32>
    %54 = tpu.matmul %37, %53, %cst_19 {dimension_numbers = #tpu.dot_dimension_numbers<[2], [2], [1], [1], [0, 0, 0, 1, 1, 1], [0], [0]>} : vector<4x8x16xbf16>, vector<4x16x16xbf16>, vector<4x8x16xf32> -> vector<4x8x16xf32>
    %55 = vector.shape_cast %54 : vector<4x8x16xf32> to vector<32x16xf32>
    %c0_20 = arith.constant 0 : index
    %c0_21 = arith.constant 0 : index
    %56 = vector.load %arg3[%c0_20, %c0_21] : memref<32x32xbf16, #tpu.memory_space<vmem>>, vector<32x32xbf16>
    %57 = arith.truncf %55 : vector<32x16xf32> to vector<32x16xbf16>
    %cst_22 = arith.constant dense<0.000000e+00> : vector<32x16xf32>
    %58 = tpu.matmul %56, %57, %cst_22 {dimension_numbers = #tpu.dot_dimension_numbers<[1], [0], [0], [1], [0, 0, 1, 1], [], []>} : vector<32x32xbf16>, vector<32x16xbf16>, vector<32x16xf32> -> vector<32x16xf32>
    %c0_23 = arith.constant 0 : index
    %c0_24 = arith.constant 0 : index
    %59 = vector.load %arg4[%c0_23, %c0_24] : memref<32x1xf32, #tpu.memory_space<vmem>>, vector<32x1xf32>
    %60 = vector.broadcast %59 : vector<32x1xf32> to vector<32x16xf32>
    %61 = arith.addf %58, %60 : vector<32x16xf32>
    %62 = arith.addf %0, %61 : vector<32x16xf32>
    %c0_25 = arith.constant 0 : index
    %c0_26 = arith.constant 0 : index
    %63 = vector.load %arg7[%c0_25, %c0_26] : memref<32x1xf32, #tpu.memory_space<vmem>>, vector<32x1xf32>
    %c0_27 = arith.constant 0 : index
    %c0_28 = arith.constant 0 : index
    %64 = vector.load %arg8[%c0_27, %c0_28] : memref<32x1xf32, #tpu.memory_space<vmem>>, vector<32x1xf32>
    %cst_29 = arith.constant dense<0.000000e+00> : vector<16xf32>
    %65 = vector.multi_reduction <add>, %62, %cst_29 [0] : vector<32x16xf32> to vector<16xf32>
    %66 = vector.shape_cast %65 : vector<16xf32> to vector<1x16xf32>
    %cst_30 = arith.constant 3.200000e+01 : f32
    %67 = vector.broadcast %cst_30 : f32 to vector<1x16xf32>
    %68 = arith.divf %66, %67 : vector<1x16xf32>
    %69 = vector.broadcast %68 : vector<1x16xf32> to vector<32x16xf32>
    %70 = arith.subf %62, %69 : vector<32x16xf32>
    %71 = arith.mulf %70, %70 : vector<32x16xf32>
    %cst_31 = arith.constant dense<0.000000e+00> : vector<16xf32>
    %72 = vector.multi_reduction <add>, %71, %cst_31 [0] : vector<32x16xf32> to vector<16xf32>
    %73 = vector.shape_cast %72 : vector<16xf32> to vector<1x16xf32>
    %cst_32 = arith.constant 3.200000e+01 : f32
    %74 = vector.broadcast %cst_32 : f32 to vector<1x16xf32>
    %75 = arith.divf %73, %74 : vector<1x16xf32>
    %cst_33 = arith.constant 9.99999974E-6 : f32
    %76 = vector.broadcast %cst_33 : f32 to vector<1x16xf32>
    %77 = arith.addf %75, %76 : vector<1x16xf32>
    %78 = math.rsqrt %77 : vector<1x16xf32>
    %79 = vector.broadcast %78 : vector<1x16xf32> to vector<32x16xf32>
    %80 = arith.mulf %70, %79 : vector<32x16xf32>
    %81 = vector.broadcast %63 : vector<32x1xf32> to vector<32x16xf32>
    %82 = arith.mulf %80, %81 : vector<32x16xf32>
    %83 = vector.broadcast %64 : vector<32x1xf32> to vector<32x16xf32>
    %84 = arith.addf %82, %83 : vector<32x16xf32>
    %c0_34 = arith.constant 0 : index
    %c0_35 = arith.constant 0 : index
    %85 = vector.load %arg9[%c0_34, %c0_35] : memref<64x32xbf16, #tpu.memory_space<vmem>>, vector<64x32xbf16>
    %86 = arith.truncf %84 : vector<32x16xf32> to vector<32x16xbf16>
    %cst_36 = arith.constant dense<0.000000e+00> : vector<64x16xf32>
    %87 = tpu.matmul %85, %86, %cst_36 {dimension_numbers = #tpu.dot_dimension_numbers<[1], [0], [0], [1], [0, 0, 1, 1], [], []>} : vector<64x32xbf16>, vector<32x16xbf16>, vector<64x16xf32> -> vector<64x16xf32>
    %c0_37 = arith.constant 0 : index
    %c0_38 = arith.constant 0 : index
    %88 = vector.load %arg10[%c0_37, %c0_38] : memref<64x1xf32, #tpu.memory_space<vmem>>, vector<64x1xf32>
    %89 = vector.broadcast %88 : vector<64x1xf32> to vector<64x16xf32>
    %90 = arith.addf %87, %89 : vector<64x16xf32>
    %91 = arith.mulf %90, %90 : vector<64x16xf32>
    %92 = arith.mulf %90, %91 : vector<64x16xf32>
    %cst_39 = arith.constant 4.471500e-02 : f32
    %93 = vector.broadcast %cst_39 : f32 to vector<64x16xf32>
    %94 = arith.mulf %93, %92 : vector<64x16xf32>
    %95 = arith.addf %90, %94 : vector<64x16xf32>
    %cst_40 = arith.constant 0.797884583 : f32
    %96 = vector.broadcast %cst_40 : f32 to vector<64x16xf32>
    %97 = arith.mulf %96, %95 : vector<64x16xf32>
    %98 = math.tanh %97 : vector<64x16xf32>
    %cst_41 = arith.constant 1.000000e+00 : f32
    %99 = vector.broadcast %cst_41 : f32 to vector<64x16xf32>
    %100 = arith.addf %99, %98 : vector<64x16xf32>
    %cst_42 = arith.constant 5.000000e-01 : f32
    %101 = vector.broadcast %cst_42 : f32 to vector<64x16xf32>
    %102 = arith.mulf %101, %100 : vector<64x16xf32>
    %103 = arith.mulf %90, %102 : vector<64x16xf32>
    %c0_43 = arith.constant 0 : index
    %c0_44 = arith.constant 0 : index
    %104 = vector.load %arg11[%c0_43, %c0_44] : memref<32x64xbf16, #tpu.memory_space<vmem>>, vector<32x64xbf16>
    %105 = arith.truncf %103 : vector<64x16xf32> to vector<64x16xbf16>
    %cst_45 = arith.constant dense<0.000000e+00> : vector<32x16xf32>
    %106 = tpu.matmul %104, %105, %cst_45 {dimension_numbers = #tpu.dot_dimension_numbers<[1], [0], [0], [1], [0, 0, 1, 1], [], []>} : vector<32x64xbf16>, vector<64x16xbf16>, vector<32x16xf32> -> vector<32x16xf32>
    %c0_46 = arith.constant 0 : index
    %c0_47 = arith.constant 0 : index
    %107 = vector.load %arg12[%c0_46, %c0_47] : memref<32x1xf32, #tpu.memory_space<vmem>>, vector<32x1xf32>
    %108 = vector.broadcast %107 : vector<32x1xf32> to vector<32x16xf32>
    %109 = arith.addf %106, %108 : vector<32x16xf32>
    %110 = arith.addf %62, %109 : vector<32x16xf32>
    %c0_48 = arith.constant 0 : index
    %c0_49 = arith.constant 0 : index
    %111 = vector.load %arg14[%c0_48, %c0_49] : memref<32x16xf32, #tpu.memory_space<vmem>>, vector<32x16xf32>
    tpu.vector_store %arg14[%c0_48, %c0_49], %110 {strides = array<i32>} : memref<32x16xf32, #tpu.memory_space<vmem>>, vector<32x16xf32>,
    return
  }
}

</mosaic_0001>

<llo_original>
// kernel: protein_encoder_forward.1
$region0: #{protein_encoder_forward.1}
  #allocation0 [shape = 'u32[]', space=smem, size = 0x4, offset = 0x4, fixed_abs, tag = 'smem constant byte address 0x4 - core index']
  #allocation1 [shape = 'u32[72,128]{1,0:T(1,128)}', space=vmem, size = 0x9000, scoped, tag = 'internal scratch']
  %s0 = inlined_call_operand.vmem [shape: f32[32,16], index: 0, kind: input, shape index: {}]
  %s1 = inlined_call_operand.vmem [shape: bf16[96,32], index: 1, kind: input, shape index: {}]
  %s2 = inlined_call_operand.vmem [shape: f32[96,1], index: 2, kind: input, shape index: {}]
  %s3 = inlined_call_operand.vmem [shape: bf16[32,32], index: 3, kind: input, shape index: {}]
  %s4 = inlined_call_operand.vmem [shape: f32[32,1], index: 4, kind: input, shape index: {}]
  %s5 = inlined_call_operand.vmem [shape: f32[32,1], index: 5, kind: input, shape index: {}]
  %s6 = inlined_call_operand.vmem [shape: f32[32,1], index: 6, kind: input, shape index: {}]
  %s7 = inlined_call_operand.vmem [shape: f32[32,1], index: 7, kind: input, shape index: {}]
  %s8 = inlined_call_operand.vmem [shape: f32[32,1], index: 8, kind: input, shape index: {}]
  %s9 = inlined_call_operand.vmem [shape: bf16[64,32], index: 9, kind: input, shape index: {}]
  %s10 = inlined_call_operand.vmem [shape: f32[64,1], index: 10, kind: input, shape index: {}]
  %s11 = inlined_call_operand.vmem [shape: bf16[32,64], index: 11, kind: input, shape index: {}]
  %s12 = inlined_call_operand.vmem [shape: f32[32,1], index: 12, kind: input, shape index: {}]
  %s13 = inlined_call_operand.vmem [shape: f32[16,16], index: 13, kind: input, shape index: {}]
  %s14 = inlined_call_operand.vmem [shape: f32[32,16], index: 14, kind: output, shape index: {}]
  %s15 = sld [smem:[#allocation0]]
  $region66: #{protein_encoder_forward.1} parent=0
    _
  %s17 = ssub.s32 1, %s15
  %s18 = scalar_select 0, %s17, %s15
  // Predicated region
  $region2: #{protein_encoder_forward.1} parent=0 // pred_check
    _
  $region3: #{protein_encoder_forward.1} parent=0 // pred_check_branch
    %20 = sbr.rel (0) target = $region5
  $region4: #{protein_encoder_forward.1} parent=0 // pred_region
    _
  $region5: #{protein_encoder_forward.1} parent=0 // pred_fallthru
    _
  // Predicated region
  $region6: #{protein_encoder_forward.1} parent=0 // pred_check
    _
  $region7: #{protein_encoder_forward.1} parent=0 // pred_check_branch
    %22 = sbr.rel (0) target = $region9
  $region8: #{protein_encoder_forward.1} parent=0 // pred_region
    _
  $region9: #{protein_encoder_forward.1} parent=0 // pred_fallthru
    _
  // Predicated region
  $region10: #{protein_encoder_forward.1} parent=0 // pred_check
    _
  $region11: #{protein_encoder_forward.1} parent=0 // pred_check_branch
    %24 = sbr.rel (0) target = $region13
  $region12: #{protein_encoder_forward.1} parent=0 // pred_region
    _
  $region13: #{protein_encoder_forward.1} parent=0 // pred_fallthru
    _
  // Predicated region
  $region14: #{protein_encoder_forward.1} parent=0 // pred_check
    _
  $region15: #{protein_encoder_forward.1} parent=0 // pred_check_branch
    %26 = sbr.rel (0) target = $region17
  $region16: #{protein_encoder_forward.1} parent=0 // pred_region
    _
  $region17: #{protein_encoder_forward.1} parent=0 // pred_fallthru
    _
  // Predicated region
  $region18: #{protein_encoder_forward.1} parent=0 // pred_check
    _
  $region19: #{protein_encoder_forward.1} parent=0 // pred_check_branch
    %28 = sbr.rel (0) target = $region21
  $region20: #{protein_encoder_forward.1} parent=0 // pred_region
    _
  $region21: #{protein_encoder_forward.1} parent=0 // pred_fallthru
    _
  // Predicated region
  $region22: #{protein_encoder_forward.1} parent=0 // pred_check
    _
  $region23: #{protein_encoder_forward.1} parent=0 // pred_check_branch
    %30 = sbr.rel (0) target = $region25
  $region24: #{protein_encoder_forward.1} parent=0 // pred_region
    _
  $region25: #{protein_encoder_forward.1} parent=0 // pred_fallthru
    _
  // Predicated region
  $region26: #{protein_encoder_forward.1} parent=0 // pred_check
    _
  $region27: #{protein_encoder_forward.1} parent=0 // pred_check_branch
    %32 = sbr.rel (0) target = $region29
  $region28: #{protein_encoder_forward.1} parent=0 // pred_region
    _
  $region29: #{protein_encoder_forward.1} parent=0 // pred_fallthru
    _
  // Predicated region
  $region30: #{protein_encoder_forward.1} parent=0 // pred_check
    _
  $region31: #{protein_encoder_forward.1} parent=0 // pred_check_branch
    %34 = sbr.rel (0) target = $region33
  $region32: #{protein_encoder_forward.1} parent=0 // pred_region
    _
  $region33: #{protein_encoder_forward.1} parent=0 // pred_fallthru
    _
  // Predicated region
  $region34: #{protein_encoder_forward.1} parent=0 // pred_check
    _
  $region35: #{protein_encoder_forward.1} parent=0 // pred_check_branch
    %36 = sbr.rel (0) target = $region37
  $region36: #{protein_encoder_forward.1} parent=0 // pred_region
    _
  $region37: #{protein_encoder_forward.1} parent=0 // pred_fallthru
    _
  // Predicated region
  $region38: #{protein_encoder_forward.1} parent=0 // pred_check
    _
  $region39: #{protein_encoder_forward.1} parent=0 // pred_check_branch
    %38 = sbr.rel (0) target = $region41
  $region40: #{protein_encoder_forward.1} parent=0 // pred_region
    _
  $region41: #{protein_encoder_forward.1} parent=0 // pred_fallthru
    _
  // Predicated region
  $region42: #{protein_encoder_forward.1} parent=0 // pred_check
    _
  $region43: #{protein_encoder_forward.1} parent=0 // pred_check_branch
    %40 = sbr.rel (0) target = $region45
  $region44: #{protein_encoder_forward.1} parent=0 // pred_region
    _
  $region45: #{protein_encoder_forward.1} parent=0 // pred_fallthru
    _
  // Predicated region
  $region46: #{protein_encoder_forward.1} parent=0 // pred_check
    _
  $region47: #{protein_encoder_forward.1} parent=0 // pred_check_branch
    %42 = sbr.rel (0) target = $region49
  $region48: #{protein_encoder_forward.1} parent=0 // pred_region
    _
  $region49: #{protein_encoder_forward.1} parent=0 // pred_fallthru
    _
  // Predicated region
  $region50: #{protein_encoder_forward.1} parent=0 // pred_check
    _
  $region51: #{protein_encoder_forward.1} parent=0 // pred_check_branch
    %44 = sbr.rel (0) target = $region53
  $region52: #{protein_encoder_forward.1} parent=0 // pred_region
    _
  $region53: #{protein_encoder_forward.1} parent=0 // pred_fallthru
    _
  // Predicated region
  $region54: #{protein_encoder_forward.1} parent=0 // pred_check
    _
  $region55: #{protein_encoder_forward.1} parent=0 // pred_check_branch
    %46 = sbr.rel (0) target = $region57
  $region56: #{protein_encoder_forward.1} parent=0 // pred_region
    _
  $region57: #{protein_encoder_forward.1} parent=0 // pred_fallthru
    _
  %v48 = vld [vmem:[%s0] sm:$0xff]
  %v49 = vld [vmem:[%s0 + $0x8] sm:$0xff]
  %v50 = vld [vmem:[%s0 + $0x10] sm:$0xff]
  %v51 = vld [vmem:[%s0 + $0x18] sm:$0xff]
  %v52 = vld [vmem:[%s5] sm:$0xff]
  %v53 = vld [vmem:[%s5 + $0x8] sm:$0xff]
  %v54 = vld [vmem:[%s5 + $0x10] sm:$0xff]
  %v55 = vld [vmem:[%s5 + $0x18] sm:$0xff]
  %v56 = vld [vmem:[%s6] sm:$0xff]
  %v57 = vld [vmem:[%s6 + $0x8] sm:$0xff]
  %v58 = vld [vmem:[%s6 + $0x10] sm:$0xff]
  %v59 = vld [vmem:[%s6 + $0x18] sm:$0xff]
  %vm60 = vcmask 130048
  %v61 = vsel %vm60, %v48, 0.0
  %v62 = vsel %vm60, %v49, 0.0
  %v63 = vadd.f32 %v61, %v62
  %v64 = vsel %vm60, %v50, 0.0
  %v65 = vadd.f32 %v63, %v64
  %v66 = vsel %vm60, %v51, 0.0
  %v67 = vadd.f32 %v65, %v66
  %v68 = vrot.slane %v67, 4
  %v69 = vadd.f32 %v67, %v68
  %v70 = vrot.slane %v69, 2
  %v71 = vadd.f32 %v69, %v70
  %v72 = vrot.slane %v71, 1
  %v73 = vadd.f32 %v71, %v72
  %v74 = vrcp.pop 32.0
  %v75 = vmul.f32 32.0, %v74
  %v76 = vsub.f32 1.0, %v75
  %v77 = vmul.f32 %v74, %v76
  %v78 = vadd.f32 %v74, %v77
  %vm79 = vweird.f32 %v74
  %v80 = vsel %vm79, %v74, %v78
  %v81 = vmul.f32 %v73, %v80
  %v82 = vsub.f32 %v48, %v81
  %v83 = vsub.f32 %v49, %v81
  %v84 = vsub.f32 %v50, %v81
  %v85 = vsub.f32 %v51, %v81
  %v86 = vmul.f32 %v82, %v82
  %v87 = vmul.f32 %v83, %v83
  %v88 = vmul.f32 %v84, %v84
  %v89 = vmul.f32 %v85, %v85
  %v90 = vsel %vm60, %v86, 0.0
  %v91 = vsel %vm60, %v87, 0.0
  %v92 = vadd.f32 %v90, %v91
  %v93 = vsel %vm60, %v88, 0.0
  %v94 = vadd.f32 %v92, %v93
  %v95 = vsel %vm60, %v89, 0.0
  %v96 = vadd.f32 %v94, %v95
  %v97 = vrot.slane %v96, 4
  %v98 = vadd.f32 %v96, %v97
  %v99 = vrot.slane %v98, 2
  %v100 = vadd.f32 %v98, %v99
  %v101 = vrot.slane %v100, 1
  %v102 = vadd.f32 %v100, %v101
  %v103 = vmul.f32 %v102, %v80
  %v104 = vadd.f32 %v103, 1e-05
  %v105 = vrsqrt.pop %v104
  %v106 = vmul.f32 %v105, %v104
  %v107 = vmul.f32 %v106, %v105
  %v108 = vmul.f32 0.5, %v107
  %v109 = vsub.f32 1.5, %v108
  %v110 = vmul.f32 %v105, %v109
  %vm111 = vweird.f32 %v104
  %vm112 = vweird.f32 %v105
  %vm113 = vmor %vm111, %vm112
  %v114 = vsel %vm113, %v105, %v110
  %v115 = vmul.f32 %v82, %v114
  %v116 = vmul.f32 %v83, %v114
  %v117 = vmul.f32 %v84, %v114
  %v118 = vmul.f32 %v85, %v114
  %120 = vset.pattern.permute.xlu0 0
  %121 = vperm.xlu0 %120, %v52
  %v122 = vpop.permute.xlu0 %121
  %125 = vset.pattern.permute.xlu0 0
  %126 = vperm.xlu0 %125, %v53
  %v127 = vpop.permute.xlu0 %126
  %130 = vset.pattern.permute.xlu0 0
  %131 = vperm.xlu0 %130, %v54
  %v132 = vpop.permute.xlu0 %131
  %135 = vset.pattern.permute.xlu0 0
  %136 = vperm.xlu0 %135, %v55
  %v137 = vpop.permute.xlu0 %136
  %v139 = vmul.f32 %v115, %v122
  %v140 = vmul.f32 %v116, %v127
  %v141 = vmul.f32 %v117, %v132
  %v142 = vmul.f32 %v118, %v137
  %144 = vset.pattern.permute.xlu0 0
  %145 = vperm.xlu0 %144, %v56
  %v146 = vpop.permute.xlu0 %145
  %149 = vset.pattern.permute.xlu0 0
  %150 = vperm.xlu0 %149, %v57
  %v151 = vpop.permute.xlu0 %150
  %154 = vset.pattern.permute.xlu0 0
  %155 = vperm.xlu0 %154, %v58
  %v156 = vpop.permute.xlu0 %155
  %159 = vset.pattern.permute.xlu0 0
  %160 = vperm.xlu0 %159, %v59
  %v161 = vpop.permute.xlu0 %160
  %v163 = vadd.f32 %v139, %v146
  %v164 = vadd.f32 %v140, %v151
  %v165 = vadd.f32 %v141, %v156
  %v166 = vadd.f32 %v142, %v161
  %v167 = vld [vmem:[%s1] sm:$0xf]
  %v168 = vld [vmem:[%s1 + $0x4] sm:$0xf]
  %v169 = vld [vmem:[%s1 + $0x8] sm:$0xf]
  %v170 = vld [vmem:[%s1 + $0xc] sm:$0xf]
  %v171 = vld [vmem:[%s1 + $0x10] sm:$0xf]
  %v172 = vld [vmem:[%s1 + $0x14] sm:$0xf]
  %v173 = vld [vmem:[%s1 + $0x18] sm:$0xf]
  %v174 = vld [vmem:[%s1 + $0x1c] sm:$0xf]
  %v175 = vld [vmem:[%s1 + $0x20] sm:$0xf]
  %v176 = vld [vmem:[%s1 + $0x24] sm:$0xf]
  %v177 = vld [vmem:[%s1 + $0x28] sm:$0xf]
  %v178 = vld [vmem:[%s1 + $0x2c] sm:$0xf]
  %v179 = vpack.c.bf16 %v164, %v163
  %v180 = vpack.c.bf16 %v166, %v165
  %v181 = vld [vmem:[%s2] sm:$0xff]
  %v182 = vld [vmem:[%s2 + $0x8] sm:$0xff]
  %v183 = vld [vmem:[%s2 + $0x10] sm:$0xff]
  %v184 = vld [vmem:[%s2 + $0x18] sm:$0xff]
  %v185 = vld [vmem:[%s2 + $0x20] sm:$0xff]
  %v186 = vld [vmem:[%s2 + $0x28] sm:$0xff]
  %v187 = vld [vmem:[%s2 + $0x30] sm:$0xff]
  %v188 = vld [vmem:[%s2 + $0x38] sm:$0xff]
  %v189 = vld [vmem:[%s2 + $0x40] sm:$0xff]
  %v190 = vld [vmem:[%s2 + $0x48] sm:$0xff]
  %v191 = vld [vmem:[%s2 + $0x50] sm:$0xff]
  %v192 = vld [vmem:[%s2 + $0x58] sm:$0xff]
  %194 = vset.pattern.permute.xlu0 0
  %195 = vperm.xlu0 %194, %v181
  %v196 = vpop.permute.xlu0 %195
  %199 = vset.pattern.permute.xlu0 0
  %200 = vperm.xlu0 %199, %v182
  %v201 = vpop.permute.xlu0 %200
  %204 = vset.pattern.permute.xlu0 0
  %205 = vperm.xlu0 %204, %v183
  %v206 = vpop.permute.xlu0 %205
  %209 = vset.pattern.permute.xlu0 0
  %210 = vperm.xlu0 %209, %v184
  %v211 = vpop.permute.xlu0 %210
  %214 = vset.pattern.permute.xlu0 0
  %215 = vperm.xlu0 %214, %v185
  %v216 = vpop.permute.xlu0 %215
  %219 = vset.pattern.permute.xlu0 0
  %220 = vperm.xlu0 %219, %v186
  %v221 = vpop.permute.xlu0 %220
  %224 = vset.pattern.permute.xlu0 0
  %225 = vperm.xlu0 %224, %v187
  %v226 = vpop.permute.xlu0 %225
  %229 = vset.pattern.permute.xlu0 0
  %230 = vperm.xlu0 %229, %v188
  %v231 = vpop.permute.xlu0 %230
  %234 = vset.pattern.permute.xlu0 0
  %235 = vperm.xlu0 %234, %v189
  %v236 = vpop.permute.xlu0 %235
  %239 = vset.pattern.permute.xlu0 0
  %240 = vperm.xlu0 %239, %v190
  %v241 = vpop.permute.xlu0 %240
  %244 = vset.pattern.permute.xlu0 0
  %245 = vperm.xlu0 %244, %v191
  %v246 = vpop.permute.xlu0 %245
  %249 = vset.pattern.permute.xlu0 0
  %250 = vperm.xlu0 %249, %v192
  %v251 = vpop.permute.xlu0 %250
  %v265 = vunpack.c.l.b16 %v167
  %v266 = vunpack.c.l.b16 %v168
  %v267 = vunpack.c.l.b16 %v169
  %v268 = vunpack.c.l.b16 %v170
  %v269 = vunpack.c.l.b16 %v171
  %v270 = vunpack.c.l.b16 %v172
  %v271 = vunpack.c.l.b16 %v173
  %v272 = vunpack.c.l.b16 %v174
  %v273 = vunpack.c.l.b16 %v175
  %v274 = vunpack.c.l.b16 %v176
  %v275 = vunpack.c.l.b16 %v177
  %v276 = vunpack.c.l.b16 %v178
  %v277 = vpack.c.b16 %v266, %v265
  %v278 = vpack.c.b16 %v268, %v267
  %v279 = vpack.c.b16 %v270, %v269
  %v280 = vpack.c.b16 %v272, %v271
  %v281 = vpack.c.b16 %v274, %v273
  %v282 = vpack.c.b16 %v276, %v275
  %vm283 = vcmask 261120
  %v285 = vsel %vm283, %v277, 0
  %v288 = vsel %vm283, %v278, 0
  %v291 = vsel %vm283, %v279, 0
  %v294 = vsel %vm283, %v280, 0
  %v297 = vsel %vm283, %v281, 0
  %v300 = vsel %vm283, %v282, 0
  %302 = vmatpush.bf16.msra.mxu0 0
  %303 = vmatpush.bf16.msra.mxu0 0
  %304 = vmatpush.bf16.msra.mxu0 0
  %305 = vmatpush.bf16.msra.mxu0 0
  %306 = vmatpush.bf16.msra.mxu0 0
  %307 = vmatpush.bf16.msra.mxu0 0
  %308 = vmatpush.bf16.msra.mxu0 %v180
  %309 = vmatpush.bf16.msra.mxu0 %v179
  %310 = vmatmul.bf16.gmra.mxu0 %v285
  %v311 = vpop.f32.mrf.mxu0
  %v312 = vadd.f32 %v196, %v311
  %v313 = vpop.f32.mrf.mxu0
  %v314 = vadd.f32 %v201, %v313
  %315 = vmatmul.bf16.gmra.mxu0 %v288
  %v316 = vpop.f32.mrf.mxu0
  %v317 = vadd.f32 %v206, %v316
  %v318 = vpop.f32.mrf.mxu0
  %v319 = vadd.f32 %v211, %v318
  %320 = vmatmul.bf16.gmra.mxu0 %v291
  %v321 = vpop.f32.mrf.mxu0
  %v322 = vadd.f32 %v216, %v321
  %v323 = vpop.f32.mrf.mxu0
  %v324 = vadd.f32 %v221, %v323
  %325 = vmatmul.bf16.gmra.mxu0 %v294
  %v326 = vpop.f32.mrf.mxu0
  %v327 = vadd.f32 %v226, %v326
  %v328 = vpop.f32.mrf.mxu0
  %v329 = vadd.f32 %v231, %v328
  %330 = vmatmul.bf16.gmra.mxu0 %v297
  %v331 = vpop.f32.mrf.mxu0
  %v332 = vadd.f32 %v236, %v331
  %v333 = vpop.f32.mrf.mxu0
  %v334 = vadd.f32 %v241, %v333
  %335 = vmatmul.bf16.gmra.mxu0 %v300
  %v336 = vpop.f32.mrf.mxu0
  %v337 = vadd.f32 %v246, %v336
  %v338 = vpop.f32.mrf.mxu0
  %v339 = vadd.f32 %v251, %v338
  %340 = vdwg.mxu0
  %v341 = vpack.c.bf16 %v312, %v312
  %v342 = vpack.c.bf16 %v314, %v314
  %v343 = vpack.c.bf16 %v317, %v317
  %v344 = vpack.c.bf16 %v319, %v319
  %v345 = vpack.c.bf16 %v322, %v322
  %v346 = vpack.c.bf16 %v324, %v324
  %v347 = vpack.c.bf16 %v327, %v327
  %v348 = vpack.c.bf16 %v329, %v329
  %v349 = vpack.c.bf16 %v332, %v332
  %v350 = vpack.c.bf16 %v334, %v334
  %v351 = vpack.c.bf16 %v337, %v337
  %v352 = vpack.c.bf16 %v339, %v339
  %v353 = vld [vmem:[%s13] sm:$0xff]
  %v354 = vld [vmem:[%s13 + $0x8] sm:$0xff]
  %355 = vxpose.xlu0.c.b16.start [1/8] %v341, 128
  %356 = vxpose.xlu0.c.b16.cont [2/8] 0, 128
  %357 = vxpose.xlu0.c.b16.cont [3/8] 0, 128
  %358 = vxpose.xlu0.c.b16.cont [4/8] 0, 128
  %359 = vxpose.xlu0.c.b16.cont [5/8] 0, 128
  %360 = vxpose.xlu0.c.b16.cont [6/8] 0, 128
  %361 = vxpose.xlu0.c.b16.cont [7/8] 0, 128
  %362 = vxpose.xlu0.c.b16.end [8/8] 0, 128
  %v363 = vpop.trf.xlu0
  %v364 = vpop.trf.xlu0
  %v365 = vpop.trf.xlu0
  %v366 = vpop.trf.xlu0
  %v367 = vpop.trf.xlu0
  %v368 = vpop.trf.xlu0
  %v369 = vpop.trf.xlu0
  %v370 = vpop.trf.xlu0
  %vm371 = vcmask 64512
  %v373 = vsel %vm371, %v363, 0
  %vm375 = vcmask 1043456
  %v377 = vsel %vm375, %v345, 0
  %379 = vmatpush.bf16.msra.mxu0 0
  %380 = vmatpush.bf16.msra.mxu0 0
  %381 = vmatpush.bf16.msra.mxu0 0
  %382 = vmatpush.bf16.msra.mxu0 0
  %383 = vmatpush.bf16.msra.mxu0 0
  %384 = vmatpush.bf16.msra.mxu0 0
  %385 = vmatpush.bf16.msra.mxu0 0
  %386 = vmatpush.bf16.msra.mxu0 %v377
  %387 = vmatmul.bf16.gmra.mxu0 %v373
  %v388 = vpop.f32.mrf.mxu0
  %v389 = vadd.f32 %v353, %v388
  %v390 = vpop.f32.mrf.mxu0
  %v391 = vadd.f32 %v354, %v390
  %392 = vdwg.mxu0
  %393 = vxpose.xlu0.c.b16.start [1/8] %v342, 128
  %394 = vxpose.xlu0.c.b16.cont [2/8] 0, 128
  %395 = vxpose.xlu0.c.b16.cont [3/8] 0, 128
  %396 = vxpose.xlu0.c.b16.cont [4/8] 0, 128
  %397 = vxpose.xlu0.c.b16.cont [5/8] 0, 128
  %398 = vxpose.xlu0.c.b16.cont [6/8] 0, 128
  %399 = vxpose.xlu0.c.b16.cont [7/8] 0, 128
  %400 = vxpose.xlu0.c.b16.end [8/8] 0, 128
  %v401 = vpop.trf.xlu0
  %v402 = vpop.trf.xlu0
  %v403 = vpop.trf.xlu0
  %v404 = vpop.trf.xlu0
  %v405 = vpop.trf.xlu0
  %v406 = vpop.trf.xlu0
  %v407 = vpop.trf.xlu0
  %v408 = vpop.trf.xlu0
  %v410 = vsel %vm371, %v401, 0
  %v413 = vsel %vm375, %v346, 0
  %415 = vmatpush.bf16.msra.mxu0 0
  %416 = vmatpush.bf16.msra.mxu0 0
  %417 = vmatpush.bf16.msra.mxu0 0
  %418 = vmatpush.bf16.msra.mxu0 0
  %419 = vmatpush.bf16.msra.mxu0 0
  %420 = vmatpush.bf16.msra.mxu0 0
  %421 = vmatpush.bf16.msra.mxu0 0
  %422 = vmatpush.bf16.msra.mxu0 %v413
  %423 = vmatmul.bf16.gmra.mxu0 %v410
  %v424 = vpop.f32.mrf.mxu0
  %v425 = vadd.f32 %v353, %v424
  %v426 = vpop.f32.mrf.mxu0
  %v427 = vadd.f32 %v354, %v426
  %428 = vdwg.mxu0
  %429 = vxpose.xlu0.c.b16.start [1/8] %v343, 128
  %430 = vxpose.xlu0.c.b16.cont [2/8] 0, 128
  %431 = vxpose.xlu0.c.b16.cont [3/8] 0, 128
  %432 = vxpose.xlu0.c.b16.cont [4/8] 0, 128
  %433 = vxpose.xlu0.c.b16.cont [5/8] 0, 128
  %434 = vxpose.xlu0.c.b16.cont [6/8] 0, 128
  %435 = vxpose.xlu0.c.b16.cont [7/8] 0, 128
  %436 = vxpose.xlu0.c.b16.end [8/8] 0, 128
  %v437 = vpop.trf.xlu0
  %v438 = vpop.trf.xlu0
  %v439 = vpop.trf.xlu0
  %v440 = vpop.trf.xlu0
  %v441 = vpop.trf.xlu0
  %v442 = vpop.trf.xlu0
  %v443 = vpop.trf.xlu0
  %v444 = vpop.trf.xlu0
  %v446 = vsel %vm371, %v437, 0
  %v449 = vsel %vm375, %v347, 0
  %451 = vmatpush.bf16.msra.mxu0 0
  %452 = vmatpush.bf16.msra.mxu0 0
  %453 = vmatpush.bf16.msra.mxu0 0
  %454 = vmatpush.bf16.msra.mxu0 0
  %455 = vmatpush.bf16.msra.mxu0 0
  %456 = vmatpush.bf16.msra.mxu0 0
  %457 = vmatpush.bf16.msra.mxu0 0
  %458 = vmatpush.bf16.msra.mxu0 %v449
  %459 = vmatmul.bf16.gmra.mxu0 %v446
  %v460 = vpop.f32.mrf.mxu0
  %v461 = vadd.f32 %v353, %v460
  %v462 = vpop.f32.mrf.mxu0
  %v463 = vadd.f32 %v354, %v462
  %464 = vdwg.mxu0
  %465 = vxpose.xlu0.c.b16.start [1/8] %v344, 128
  %466 = vxpose.xlu0.c.b16.cont [2/8] 0, 128
  %467 = vxpose.xlu0.c.b16.cont [3/8] 0, 128
  %468 = vxpose.xlu0.c.b16.cont [4/8] 0, 128
  %469 = vxpose.xlu0.c.b16.cont [5/8] 0, 128
  %470 = vxpose.xlu0.c.b16.cont [6/8] 0, 128
  %471 = vxpose.xlu0.c.b16.cont [7/8] 0, 128
  %472 = vxpose.xlu0.c.b16.end [8/8] 0, 128
  %v473 = vpop.trf.xlu0
  %v474 = vpop.trf.xlu0
  %v475 = vpop.trf.xlu0
  %v476 = vpop.trf.xlu0
  %v477 = vpop.trf.xlu0
  %v478 = vpop.trf.xlu0
  %v479 = vpop.trf.xlu0
  %v480 = vpop.trf.xlu0
  %v482 = vsel %vm371, %v473, 0
  %v485 = vsel %vm375, %v348, 0
  %487 = vmatpush.bf16.msra.mxu0 0
  %488 = vmatpush.bf16.msra.mxu0 0
  %489 = vmatpush.bf16.msra.mxu0 0
  %490 = vmatpush.bf16.msra.mxu0 0
  %491 = vmatpush.bf16.msra.mxu0 0
  %492 = vmatpush.bf16.msra.mxu0 0
  %493 = vmatpush.bf16.msra.mxu0 0
  %494 = vmatpush.bf16.msra.mxu0 %v485
  %495 = vmatmul.bf16.gmra.mxu0 %v482
  %v496 = vpop.f32.mrf.mxu0
  %v497 = vadd.f32 %v353, %v496
  %v498 = vpop.f32.mrf.mxu0
  %v499 = vadd.f32 %v354, %v498
  %500 = vdwg.mxu0
  %v501 = vsel %vm60, %v389, -inf
  %502 = vmax.xlane.f32.xlu0 %v501
  %v503 = vpop.xlane.xlu0 %502
  %v504 = vsel %vm60, %v391, -inf
  %505 = vmax.xlane.f32.xlu0 %v504
  %v506 = vpop.xlane.xlu0 %505
  %v507 = vsel %vm60, %v425, -inf
  %508 = vmax.xlane.f32.xlu0 %v507
  %v509 = vpop.xlane.xlu0 %508
  %v510 = vsel %vm60, %v427, -inf
  %511 = vmax.xlane.f32.xlu0 %v510
  %v512 = vpop.xlane.xlu0 %511
  %v513 = vsel %vm60, %v461, -inf
  %514 = vmax.xlane.f32.xlu0 %v513
  %v515 = vpop.xlane.xlu0 %514
  %v516 = vsel %vm60, %v463, -inf
  %517 = vmax.xlane.f32.xlu0 %v516
  %v518 = vpop.xlane.xlu0 %517
  %v519 = vsel %vm60, %v497, -inf
  %520 = vmax.xlane.f32.xlu0 %v519
  %v521 = vpop.xlane.xlu0 %520
  %v522 = vsel %vm60, %v499, -inf
  %523 = vmax.xlane.f32.xlu0 %v522
  %v524 = vpop.xlane.xlu0 %523
  %v525 = vsub.f32 %v389, %v503
  %v526 = vsub.f32 %v391, %v506
  %v527 = vsub.f32 %v425, %v509
  %v528 = vsub.f32 %v427, %v512
  %v529 = vsub.f32 %v461, %v515
  %v530 = vsub.f32 %v463, %v518
  %v531 = vsub.f32 %v497, %v521
  %v532 = vsub.f32 %v499, %v524
  %v533 = vmul.f32 %v525, 1.442695
  %v534 = vpow.pop %v533
  %v535 = vmul.f32 %v526, 1.442695
  %v536 = vpow.pop %v535
  %v537 = vmul.f32 %v527, 1.442695
  %v538 = vpow.pop %v537
  %v539 = vmul.f32 %v528, 1.442695
  %v540 = vpow.pop %v539
  %v541 = vmul.f32 %v529, 1.442695
  %v542 = vpow.pop %v541
  %v543 = vmul.f32 %v530, 1.442695
  %v544 = vpow.pop %v543
  %v545 = vmul.f32 %v531, 1.442695
  %v546 = vpow.pop %v545
  %v547 = vmul.f32 %v532, 1.442695
  %v548 = vpow.pop %v547
  %v549 = vsel %vm60, %v534, 0.0
  %550 = vadd.xlane.f32.xlu0 %v549
  %v551 = vpop.xlane.xlu0 %550
  %v552 = vsel %vm60, %v536, 0.0
  %553 = vadd.xlane.f32.xlu0 %v552
  %v554 = vpop.xlane.xlu0 %553
  %v555 = vsel %vm60, %v538, 0.0
  %556 = vadd.xlane.f32.xlu0 %v555
  %v557 = vpop.xlane.xlu0 %556
  %v558 = vsel %vm60, %v540, 0.0
  %559 = vadd.xlane.f32.xlu0 %v558
  %v560 = vpop.xlane.xlu0 %559
  %v561 = vsel %vm60, %v542, 0.0
  %562 = vadd.xlane.f32.xlu0 %v561
  %v563 = vpop.xlane.xlu0 %562
  %v564 = vsel %vm60, %v544, 0.0
  %565 = vadd.xlane.f32.xlu0 %v564
  %v566 = vpop.xlane.xlu0 %565
  %v567 = vsel %vm60, %v546, 0.0
  %568 = vadd.xlane.f32.xlu0 %v567
  %v569 = vpop.xlane.xlu0 %568
  %v570 = vsel %vm60, %v548, 0.0
  %571 = vadd.xlane.f32.xlu0 %v570
  %v572 = vpop.xlane.xlu0 %571
  %v573 = vrcp.pop %v551
  %v574 = vrcp.pop %v554
  %v575 = vrcp.pop %v557
  %v576 = vrcp.pop %v560
  %v577 = vrcp.pop %v563
  %v578 = vrcp.pop %v566
  %v579 = vrcp.pop %v569
  %v580 = vrcp.pop %v572
  %v581 = vmul.f32 %v534, %v573
  %v582 = vmul.f32 %v536, %v574
  %v583 = vmul.f32 %v538, %v575
  %v584 = vmul.f32 %v540, %v576
  %v585 = vmul.f32 %v542, %v577
  %v586 = vmul.f32 %v544, %v578
  %v587 = vmul.f32 %v546, %v579
  %v588 = vmul.f32 %v548, %v580
  %v589 = vpack.c.bf16 %v581, %v581
  %v590 = vpack.c.bf16 %v582, %v582
  %v591 = vpack.c.bf16 %v583, %v583
  %v592 = vpack.c.bf16 %v584, %v584
  %v593 = vpack.c.bf16 %v585, %v585
  %v594 = vpack.c.bf16 %v586, %v586
  %v595 = vpack.c.bf16 %v587, %v587
  %v596 = vpack.c.bf16 %v588, %v588
  %v599 = vunpack.c.l.b16 %v589
  %v600 = vunpack.c.l.b16 %v590
  %v601 = vpack.c.b16 %v600, %v599
  %v603 = vsel %vm60, %v349, 0
  %v606 = vsel %vm60, %v601, 0
  %608 = vmatpush.bf16.xpose.msra.mxu0 0
  %609 = vmatpush.bf16.xpose.msra.mxu0 0
  %610 = vmatpush.bf16.xpose.msra.mxu0 0
  %611 = vmatpush.bf16.xpose.msra.mxu0 0
  %612 = vmatpush.bf16.xpose.msra.mxu0 0
  %613 = vmatpush.bf16.xpose.msra.mxu0 0
  %614 = vmatpush.bf16.xpose.msra.mxu0 0
  %615 = vmatpush.bf16.xpose.msra.mxu0 %v606
  %616 = vmatmul.bf16.gmra.mxu0 %v603
  %v617 = vpop.f32.mrf.mxu0
  %v618 = vadd.f32 0.0, %v617
  %v619 = vpop.f32.mrf.mxu0
  %620 = vdwg.mxu0
  %v623 = vunpack.c.l.b16 %v591
  %v624 = vunpack.c.l.b16 %v592
  %v625 = vpack.c.b16 %v624, %v623
  %v627 = vsel %vm60, %v350, 0
  %v630 = vsel %vm60, %v625, 0
  %632 = vmatpush.bf16.xpose.msra.mxu0 0
  %633 = vmatpush.bf16.xpose.msra.mxu0 0
  %634 = vmatpush.bf16.xpose.msra.mxu0 0
  %635 = vmatpush.bf16.xpose.msra.mxu0 0
  %636 = vmatpush.bf16.xpose.msra.mxu0 0
  %637 = vmatpush.bf16.xpose.msra.mxu0 0
  %638 = vmatpush.bf16.xpose.msra.mxu0 0
  %639 = vmatpush.bf16.xpose.msra.mxu0 %v630
  %640 = vmatmul.bf16.gmra.mxu0 %v627
  %v641 = vpop.f32.mrf.mxu0
  %v642 = vadd.f32 0.0, %v641
  %v643 = vpop.f32.mrf.mxu0
  %644 = vdwg.mxu0
  %v647 = vunpack.c.l.b16 %v593
  %v648 = vunpack.c.l.b16 %v594
  %v649 = vpack.c.b16 %v648, %v647
  %v651 = vsel %vm60, %v351, 0
  %v654 = vsel %vm60, %v649, 0
  %656 = vmatpush.bf16.xpose.msra.mxu0 0
  %657 = vmatpush.bf16.xpose.msra.mxu0 0
  %658 = vmatpush.bf16.xpose.msra.mxu0 0
  %659 = vmatpush.bf16.xpose.msra.mxu0 0
  %660 = vmatpush.bf16.xpose.msra.mxu0 0
  %661 = vmatpush.bf16.xpose.msra.mxu0 0
  %662 = vmatpush.bf16.xpose.msra.mxu0 0
  %663 = vmatpush.bf16.xpose.msra.mxu0 %v654
  %664 = vmatmul.bf16.gmra.mxu0 %v651
  %v665 = vpop.f32.mrf.mxu0
  %v666 = vadd.f32 0.0, %v665
  %v667 = vpop.f32.mrf.mxu0
  %668 = vdwg.mxu0
  %v671 = vunpack.c.l.b16 %v595
  %v672 = vunpack.c.l.b16 %v596
  %v673 = vpack.c.b16 %v672, %v671
  %v675 = vsel %vm60, %v352, 0
  %v678 = vsel %vm60, %v673, 0
  %680 = vmatpush.bf16.xpose.msra.mxu0 0
  %681 = vmatpush.bf16.xpose.msra.mxu0 0
  %682 = vmatpush.bf16.xpose.msra.mxu0 0
  %683 = vmatpush.bf16.xpose.msra.mxu0 0
  %684 = vmatpush.bf16.xpose.msra.mxu0 0
  %685 = vmatpush.bf16.xpose.msra.mxu0 0
  %686 = vmatpush.bf16.xpose.msra.mxu0 0
  %687 = vmatpush.bf16.xpose.msra.mxu0 %v678
  %688 = vmatmul.bf16.gmra.mxu0 %v675
  %v689 = vpop.f32.mrf.mxu0
  %v690 = vadd.f32 0.0, %v689
  %v691 = vpop.f32.mrf.mxu0
  %692 = vdwg.mxu0
  %v693 = vld [vmem:[%s3] sm:$0xf]
  %v694 = vld [vmem:[%s3 + $0x4] sm:$0xf]
  %v695 = vld [vmem:[%s3 + $0x8] sm:$0xf]
  %v696 = vld [vmem:[%s3 + $0xc] sm:$0xf]
  %v697 = vpack.c.bf16 %v642, %v618
  %v698 = vpack.c.bf16 %v690, %v666
  %v699 = vld [vmem:[%s4] sm:$0xff]
  %v700 = vld [vmem:[%s4 + $0x8] sm:$0xff]
  %v701 = vld [vmem:[%s4 + $0x10] sm:$0xff]
  %v702 = vld [vmem:[%s4 + $0x18] sm:$0xff]
  %704 = vset.pattern.permute.xlu0 0
  %705 = vperm.xlu0 %704, %v699
  %v706 = vpop.permute.xlu0 %705
  %709 = vset.pattern.permute.xlu0 0
  %710 = vperm.xlu0 %709, %v700
  %v711 = vpop.permute.xlu0 %710
  %714 = vset.pattern.permute.xlu0 0
  %715 = vperm.xlu0 %714, %v701
  %v716 = vpop.permute.xlu0 %715
  %719 = vset.pattern.permute.xlu0 0
  %720 = vperm.xlu0 %719, %v702
  %v721 = vpop.permute.xlu0 %720
  %v727 = vunpack.c.l.b16 %v693
  %v728 = vunpack.c.l.b16 %v694
  %v729 = vunpack.c.l.b16 %v695
  %v730 = vunpack.c.l.b16 %v696
  %v731 = vpack.c.b16 %v728, %v727
  %v732 = vpack.c.b16 %v730, %v729
  %v734 = vsel %vm283, %v731, 0
  %v737 = vsel %vm283, %v732, 0
  %739 = vmatpush.bf16.msra.mxu0 0
  %740 = vmatpush.bf16.msra.mxu0 0
  %741 = vmatpush.bf16.msra.mxu0 0
  %742 = vmatpush.bf16.msra.mxu0 0
  %743 = vmatpush.bf16.msra.mxu0 0
  %744 = vmatpush.bf16.msra.mxu0 0
  %745 = vmatpush.bf16.msra.mxu0 %v698
  %746 = vmatpush.bf16.msra.mxu0 %v697
  %747 = vmatmul.bf16.gmra.mxu0 %v734
  %v748 = vpop.f32.mrf.mxu0
  %v749 = vadd.f32 %v706, %v748
  %v750 = vpop.f32.mrf.mxu0
  %v751 = vadd.f32 %v711, %v750
  %752 = vmatmul.bf16.gmra.mxu0 %v737
  %v753 = vpop.f32.mrf.mxu0
  %v754 = vadd.f32 %v716, %v753
  %v755 = vpop.f32.mrf.mxu0
  %v756 = vadd.f32 %v721, %v755
  %757 = vdwg.mxu0
  %v758 = vadd.f32 %v48, %v749
  %v759 = vadd.f32 %v49, %v751
  %v760 = vadd.f32 %v50, %v754
  %v761 = vadd.f32 %v51, %v756
  %v762 = vld [vmem:[%s7] sm:$0xff]
  %v763 = vld [vmem:[%s7 + $0x8] sm:$0xff]
  %v764 = vld [vmem:[%s7 + $0x10] sm:$0xff]
  %v765 = vld [vmem:[%s7 + $0x18] sm:$0xff]
  %v766 = vld [vmem:[%s8] sm:$0xff]
  %v767 = vld [vmem:[%s8 + $0x8] sm:$0xff]
  %v768 = vld [vmem:[%s8 + $0x10] sm:$0xff]
  %v769 = vld [vmem:[%s8 + $0x18] sm:$0xff]
  %v770 = vsel %vm60, %v758, 0.0
  %v771 = vsel %vm60, %v759, 0.0
  %v772 = vadd.f32 %v770, %v771
  %v773 = vsel %vm60, %v760, 0.0
  %v774 = vadd.f32 %v772, %v773
  %v775 = vsel %vm60, %v761, 0.0
  %v776 = vadd.f32 %v774, %v775
  %v777 = vrot.slane %v776, 4
  %v778 = vadd.f32 %v776, %v777
  %v779 = vrot.slane %v778, 2
  %v780 = vadd.f32 %v778, %v779
  %v781 = vrot.slane %v780, 1
  %v782 = vadd.f32 %v780, %v781
  %v783 = vmul.f32 %v782, %v80
  %v784 = vsub.f32 %v758, %v783
  %v785 = vsub.f32 %v759, %v783
  %v786 = vsub.f32 %v760, %v783
  %v787 = vsub.f32 %v761, %v783
  %v788 = vmul.f32 %v784, %v784
  %v789 = vmul.f32 %v785, %v785
  %v790 = vmul.f32 %v786, %v786
  %v791 = vmul.f32 %v787, %v787
  %v792 = vsel %vm60, %v788, 0.0
  %v793 = vsel %vm60, %v789, 0.0
  %v794 = vadd.f32 %v792, %v793
  %v795 = vsel %vm60, %v790, 0.0
  %v796 = vadd.f32 %v794, %v795
  %v797 = vsel %vm60, %v791, 0.0
  %v798 = vadd.f32 %v796, %v797
  %v799 = vrot.slane %v798, 4
  %v800 = vadd.f32 %v798, %v799
  %v801 = vrot.slane %v800, 2
  %v802 = vadd.f32 %v800, %v801
  %v803 = vrot.slane %v802, 1
  %v804 = vadd.f32 %v802, %v803
  %v805 = vmul.f32 %v804, %v80
  %v806 = vadd.f32 %v805, 1e-05
  %v807 = vrsqrt.pop %v806
  %v808 = vmul.f32 %v807, %v806
  %v809 = vmul.f32 %v808, %v807
  %v810 = vmul.f32 0.5, %v809
  %v811 = vsub.f32 1.5, %v810
  %v812 = vmul.f32 %v807, %v811
  %vm813 = vweird.f32 %v806
  %vm814 = vweird.f32 %v807
  %vm815 = vmor %vm813, %vm814
  %v816 = vsel %vm815, %v807, %v812
  %v817 = vmul.f32 %v784, %v816
  %v818 = vmul.f32 %v785, %v816
  %v819 = vmul.f32 %v786, %v816
  %v820 = vmul.f32 %v787, %v816
  %822 = vset.pattern.permute.xlu0 0
  %823 = vperm.xlu0 %822, %v762
  %v824 = vpop.permute.xlu0 %823
  %827 = vset.pattern.permute.xlu0 0
  %828 = vperm.xlu0 %827, %v763
  %v829 = vpop.permute.xlu0 %828
  %832 = vset.pattern.permute.xlu0 0
  %833 = vperm.xlu0 %832, %v764
  %v834 = vpop.permute.xlu0 %833
  %837 = vset.pattern.permute.xlu0 0
  %838 = vperm.xlu0 %837, %v765
  %v839 = vpop.permute.xlu0 %838
  %v841 = vmul.f32 %v817, %v824
  %v842 = vmul.f32 %v818, %v829
  %v843 = vmul.f32 %v819, %v834
  %v844 = vmul.f32 %v820, %v839
  %846 = vset.pattern.permute.xlu0 0
  %847 = vperm.xlu0 %846, %v766
  %v848 = vpop.permute.xlu0 %847
  %851 = vset.pattern.permute.xlu0 0
  %852 = vperm.xlu0 %851, %v767
  %v853 = vpop.permute.xlu0 %852
  %856 = vset.pattern.permute.xlu0 0
  %857 = vperm.xlu0 %856, %v768
  %v858 = vpop.permute.xlu0 %857
  %861 = vset.pattern.permute.xlu0 0
  %862 = vperm.xlu0 %861, %v769
  %v863 = vpop.permute.xlu0 %862
  %v865 = vadd.f32 %v841, %v848
  %v866 = vadd.f32 %v842, %v853
  %v867 = vadd.f32 %v843, %v858
  %v868 = vadd.f32 %v844, %v863
  %v869 = vld [vmem:[%s9] sm:$0xf]
  %v870 = vld [vmem:[%s9 + $0x4] sm:$0xf]
  %v871 = vld [vmem:[%s9 + $0x8] sm:$0xf]
  %v872 = vld [vmem:[%s9 + $0xc] sm:$0xf]
  %v873 = vld [vmem:[%s9 + $0x10] sm:$0xf]
  %v874 = vld [vmem:[%s9 + $0x14] sm:$0xf]
  %v875 = vld [vmem:[%s9 + $0x18] sm:$0xf]
  %v876 = vld [vmem:[%s9 + $0x1c] sm:$0xf]
  %v877 = vpack.c.bf16 %v866, %v865
  %v878 = vpack.c.bf16 %v868, %v867
  %v879 = vld [vmem:[%s10] sm:$0xff]
  %v880 = vld [vmem:[%s10 + $0x8] sm:$0xff]
  %v881 = vld [vmem:[%s10 + $0x10] sm:$0xff]
  %v882 = vld [vmem:[%s10 + $0x18] sm:$0xff]
  %v883 = vld [vmem:[%s10 + $0x20] sm:$0xff]
  %v884 = vld [vmem:[%s10 + $0x28] sm:$0xff]
  %v885 = vld [vmem:[%s10 + $0x30] sm:$0xff]
  %v886 = vld [vmem:[%s10 + $0x38] sm:$0xff]
  %888 = vset.pattern.permute.xlu0 0
  %889 = vperm.xlu0 %888, %v879
  %v890 = vpop.permute.xlu0 %889
  %893 = vset.pattern.permute.xlu0 0
  %894 = vperm.xlu0 %893, %v880
  %v895 = vpop.permute.xlu0 %894
  %898 = vset.pattern.permute.xlu0 0
  %899 = vperm.xlu0 %898, %v881
  %v900 = vpop.permute.xlu0 %899
  %903 = vset.pattern.permute.xlu0 0
  %904 = vperm.xlu0 %903, %v882
  %v905 = vpop.permute.xlu0 %904
  %908 = vset.pattern.permute.xlu0 0
  %909 = vperm.xlu0 %908, %v883
  %v910 = vpop.permute.xlu0 %909
  %913 = vset.pattern.permute.xlu0 0
  %914 = vperm.xlu0 %913, %v884
  %v915 = vpop.permute.xlu0 %914
  %918 = vset.pattern.permute.xlu0 0
  %919 = vperm.xlu0 %918, %v885
  %v920 = vpop.permute.xlu0 %919
  %923 = vset.pattern.permute.xlu0 0
  %924 = vperm.xlu0 %923, %v886
  %v925 = vpop.permute.xlu0 %924
  %v935 = vunpack.c.l.b16 %v869
  %v936 = vunpack.c.l.b16 %v870
  %v937 = vunpack.c.l.b16 %v871
  %v938 = vunpack.c.l.b16 %v872
  %v939 = vunpack.c.l.b16 %v873
  %v940 = vunpack.c.l.b16 %v874
  %v941 = vunpack.c.l.b16 %v875
  %v942 = vunpack.c.l.b16 %v876
  %v943 = vpack.c.b16 %v936, %v935
  %v944 = vpack.c.b16 %v938, %v937
  %v945 = vpack.c.b16 %v940, %v939
  %v946 = vpack.c.b16 %v942, %v941
  %v948 = vsel %vm283, %v943, 0
  %v951 = vsel %vm283, %v944, 0
  %v954 = vsel %vm283, %v945, 0
  %v957 = vsel %vm283, %v946, 0
  %959 = vmatpush.bf16.msra.mxu0 0
  %960 = vmatpush.bf16.msra.mxu0 0
  %961 = vmatpush.bf16.msra.mxu0 0
  %962 = vmatpush.bf16.msra.mxu0 0
  %963 = vmatpush.bf16.msra.mxu0 0
  %964 = vmatpush.bf16.msra.mxu0 0
  %965 = vmatpush.bf16.msra.mxu0 %v878
  %966 = vmatpush.bf16.msra.mxu0 %v877
  %967 = vmatmul.bf16.gmra.mxu0 %v948
  %v968 = vpop.f32.mrf.mxu0
  %v969 = vadd.f32 %v890, %v968
  %v970 = vpop.f32.mrf.mxu0
  %v971 = vadd.f32 %v895, %v970
  %972 = vmatmul.bf16.gmra.mxu0 %v951
  %v973 = vpop.f32.mrf.mxu0
  %v974 = vadd.f32 %v900, %v973
  %v975 = vpop.f32.mrf.mxu0
  %v976 = vadd.f32 %v905, %v975
  %977 = vmatmul.bf16.gmra.mxu0 %v954
  %v978 = vpop.f32.mrf.mxu0
  %v979 = vadd.f32 %v910, %v978
  %v980 = vpop.f32.mrf.mxu0
  %v981 = vadd.f32 %v915, %v980
  %982 = vmatmul.bf16.gmra.mxu0 %v957
  %v983 = vpop.f32.mrf.mxu0
  %v984 = vadd.f32 %v920, %v983
  %v985 = vpop.f32.mrf.mxu0
  %v986 = vadd.f32 %v925, %v985
  %987 = vdwg.mxu0
  %v988 = vmul.f32 %v969, %v969
  %v989 = vmul.f32 %v971, %v971
  %v990 = vmul.f32 %v974, %v974
  %v991 = vmul.f32 %v976, %v976
  %v992 = vmul.f32 %v979, %v979
  %v993 = vmul.f32 %v981, %v981
  %v994 = vmul.f32 %v984, %v984
  %v995 = vmul.f32 %v986, %v986
  %v996 = vmul.f32 %v969, %v988
  %v997 = vmul.f32 %v971, %v989
  %v998 = vmul.f32 %v974, %v990
  %v999 = vmul.f32 %v976, %v991
  %v1000 = vmul.f32 %v979, %v992
  %v1001 = vmul.f32 %v981, %v993
  %v1002 = vmul.f32 %v984, %v994
  %v1003 = vmul.f32 %v986, %v995
  %v1004 = vmul.f32 %v996, 0.044715
  %v1005 = vmul.f32 %v997, 0.044715
  %v1006 = vmul.f32 %v998, 0.044715
  %v1007 = vmul.f32 %v999, 0.044715
  %v1008 = vmul.f32 %v1000, 0.044715
  %v1009 = vmul.f32 %v1001, 0.044715
  %v1010 = vmul.f32 %v1002, 0.044715
  %v1011 = vmul.f32 %v1003, 0.044715
  %v1012 = vadd.f32 %v969, %v1004
  %v1013 = vadd.f32 %v971, %v1005
  %v1014 = vadd.f32 %v974, %v1006
  %v1015 = vadd.f32 %v976, %v1007
  %v1016 = vadd.f32 %v979, %v1008
  %v1017 = vadd.f32 %v981, %v1009
  %v1018 = vadd.f32 %v984, %v1010
  %v1019 = vadd.f32 %v986, %v1011
  %v1020 = vmul.f32 %v1012, 0.7978846
  %v1021 = vmul.f32 %v1013, 0.7978846
  %v1022 = vmul.f32 %v1014, 0.7978846
  %v1023 = vmul.f32 %v1015, 0.7978846
  %v1024 = vmul.f32 %v1016, 0.7978846
  %v1025 = vmul.f32 %v1017, 0.7978846
  %v1026 = vmul.f32 %v1018, 0.7978846
  %v1027 = vmul.f32 %v1019, 0.7978846
  %v1028 = vtanh.pop %v1020
  %v1029 = vtanh.pop %v1021
  %v1030 = vtanh.pop %v1022
  %v1031 = vtanh.pop %v1023
  %v1032 = vtanh.pop %v1024
  %v1033 = vtanh.pop %v1025
  %v1034 = vtanh.pop %v1026
  %v1035 = vtanh.pop %v1027
  %v1036 = vadd.f32 %v1028, 1.0
  %v1037 = vadd.f32 %v1029, 1.0
  %v1038 = vadd.f32 %v1030, 1.0
  %v1039 = vadd.f32 %v1031, 1.0
  %v1040 = vadd.f32 %v1032, 1.0
  %v1041 = vadd.f32 %v1033, 1.0
  %v1042 = vadd.f32 %v1034, 1.0
  %v1043 = vadd.f32 %v1035, 1.0
  %v1044 = vmul.f32 %v1036, 0.5
  %v1045 = vmul.f32 %v1037, 0.5
  %v1046 = vmul.f32 %v1038, 0.5
  %v1047 = vmul.f32 %v1039, 0.5
  %v1048 = vmul.f32 %v1040, 0.5
  %v1049 = vmul.f32 %v1041, 0.5
  %v1050 = vmul.f32 %v1042, 0.5
  %v1051 = vmul.f32 %v1043, 0.5
  %v1052 = vmul.f32 %v969, %v1044
  %v1053 = vmul.f32 %v971, %v1045
  %v1054 = vmul.f32 %v974, %v1046
  %v1055 = vmul.f32 %v976, %v1047
  %v1056 = vmul.f32 %v979, %v1048
  %v1057 = vmul.f32 %v981, %v1049
  %v1058 = vmul.f32 %v984, %v1050
  %v1059 = vmul.f32 %v986, %v1051
  %v1060 = vld [vmem:[%s11] sm:$0xf]
  %v1061 = vld [vmem:[%s11 + $0x4] sm:$0xf]
  %v1062 = vld [vmem:[%s11 + $0x8] sm:$0xf]
  %v1063 = vld [vmem:[%s11 + $0xc] sm:$0xf]
  %v1064 = vpack.c.bf16 %v1053, %v1052
  %v1065 = vpack.c.bf16 %v1055, %v1054
  %v1066 = vpack.c.bf16 %v1057, %v1056
  %v1067 = vpack.c.bf16 %v1059, %v1058
  %v1068 = vld [vmem:[%s12] sm:$0xff]
  %v1069 = vld [vmem:[%s12 + $0x8] sm:$0xff]
  %v1070 = vld [vmem:[%s12 + $0x10] sm:$0xff]
  %v1071 = vld [vmem:[%s12 + $0x18] sm:$0xff]
  %1073 = vset.pattern.permute.xlu0 0
  %1074 = vperm.xlu0 %1073, %v1068
  %v1075 = vpop.permute.xlu0 %1074
  %1078 = vset.pattern.permute.xlu0 0
  %1079 = vperm.xlu0 %1078, %v1069
  %v1080 = vpop.permute.xlu0 %1079
  %1083 = vset.pattern.permute.xlu0 0
  %1084 = vperm.xlu0 %1083, %v1070
  %v1085 = vpop.permute.xlu0 %1084
  %1088 = vset.pattern.permute.xlu0 0
  %1089 = vperm.xlu0 %1088, %v1071
  %v1090 = vpop.permute.xlu0 %1089
  %v1096 = vunpack.c.l.b16 %v1060
  %v1097 = vunpack.c.l.b16 %v1061
  %v1098 = vunpack.c.l.b16 %v1062
  %v1099 = vunpack.c.l.b16 %v1063
  %v1100 = vpack.c.b16 %v1097, %v1096
  %v1101 = vpack.c.b16 %v1099, %v1098
  %vm1102 = vcmask 523264
  %v1104 = vsel %vm1102, %v1100, 0
  %v1107 = vsel %vm1102, %v1101, 0
  %1109 = vmatpush.bf16.msra.mxu0 0
  %1110 = vmatpush.bf16.msra.mxu0 0
  %1111 = vmatpush.bf16.msra.mxu0 0
  %1112 = vmatpush.bf16.msra.mxu0 0
  %1113 = vmatpush.bf16.msra.mxu0 %v1067
  %1114 = vmatpush.bf16.msra.mxu0 %v1066
  %1115 = vmatpush.bf16.msra.mxu0 %v1065
  %1116 = vmatpush.bf16.msra.mxu0 %v1064
  %1117 = vmatmul.bf16.gmra.mxu0 %v1104
  %v1118 = vpop.f32.mrf.mxu0
  %v1119 = vadd.f32 %v1075, %v1118
  %v1120 = vpop.f32.mrf.mxu0
  %v1121 = vadd.f32 %v1080, %v1120
  %1122 = vmatmul.bf16.gmra.mxu0 %v1107
  %v1123 = vpop.f32.mrf.mxu0
  %v1124 = vadd.f32 %v1085, %v1123
  %v1125 = vpop.f32.mrf.mxu0
  %v1126 = vadd.f32 %v1090, %v1125
  %1127 = vdwg.mxu0
  %v1128 = vadd.f32 %v758, %v1119
  %v1129 = vadd.f32 %v759, %v1121
  %v1130 = vadd.f32 %v760, %v1124
  %v1131 = vadd.f32 %v761, %v1126
  %1132 = vst.msk [vmem:[%s14] sm:$0xff] %vm60, %v1128
  %1133 = vst.msk [vmem:[%s14 + $0x8] sm:$0xff] %vm60, %v1129
  %1134 = vst.msk [vmem:[%s14 + $0x10] sm:$0xff] %vm60, %v1130
  %1135 = vst.msk [vmem:[%s14 + $0x18] sm:$0xff] %vm60, %v1131
  // Predicated region
  $region58: #{protein_encoder_forward.1} parent=0 // pred_check
    _
  $region59: #{protein_encoder_forward.1} parent=0 // pred_check_branch
    %1137 = sbr.rel (0) target = $region61
  $region60: #{protein_encoder_forward.1} parent=0 // pred_region
    _
  $region61: #{protein_encoder_forward.1} parent=0 // pred_fallthru
    _
  // Predicated region
  $region62: #{protein_encoder_forward.1} parent=0 // pred_check
    _
  $region63: #{protein_encoder_forward.1} parent=0 // pred_check_branch
    %1139 = sbr.rel (0) target = $region65
  $region64: #{protein_encoder_forward.1} parent=0 // pred_region
    _
  $region65: #{protein_encoder_forward.1} parent=0 // pred_fallthru
    _

</llo_original>
